<compile_context>
chip_gen: v7x
topology: tpu7x:2x2x1
jax: 0.10.0
libtpu: 0.0.40
codegen_flags: <defaults>
</compile_context>

<pallas_src>
import numpy as np

import jax
import jax.numpy as jnp
from jax.experimental import pallas as pl
from jax.experimental.pallas import tpu as pltpu

_LANE = 128
_SUBLANE = 8


def _pos_emb_kernel(sin_a_ref, cos_a_ref, sin_c_ref, cos_c_ref, o_ref):
    # sin_a/cos_a: (num_tiles, cols) resident tile-base tables.
    # sin_c/cos_c: (tile_rows, cols) resident intra-tile tables (phase folded in).
    t = pl.program_id(0)
    sin_a = sin_a_ref[pl.ds(t, 1), :]  # (1, cols)
    cos_a = cos_a_ref[pl.ds(t, 1), :]  # (1, cols)
    # sin(A + C) = sinA*cosC + cosA*sinC  -> no in-kernel transcendentals.
    val = sin_a * cos_c_ref[...] + cos_a * sin_c_ref[...]
    o_ref[...] = val.astype(o_ref.dtype)


def position_embedding_forward(x, d_model, max_len, out_dtype=jnp.float32):
    """Mirrors PositionEmbedding(d_model, max_len)(x) -> (seq_len, d_model)."""
    batch_size, seq_len = x.shape
    assert seq_len <= max_len, "seq_len exceeds max_len"

    cols = d_model  # exact width: output block column == full dim, no padding/slice

    # ---- row tiling -----------------------------------------------------------------
    if seq_len < _SUBLANE:
        # Block rows must be 8-divisible or equal the full dim; tiny case uses full dim.
        tile_rows = seq_len
    else:
        rows8 = ((seq_len + _SUBLANE - 1) // _SUBLANE) * _SUBLANE
        # ~4 MiB per output tile: 2x out + 2x sinC + 2x cosC ~ 24 MiB, under the
        # 32 MiB scoped limit we request (safe on v7x's 64 MiB physical VMEM).
        target_tile_bytes = 4 * 1024 * 1024
        rows_by_vmem = max(
            _SUBLANE, (target_tile_bytes // (cols * 4)) // _SUBLANE * _SUBLANE
        )
        tile_rows = min(rows_by_vmem, rows8)
        # Guarantee >= 2 grid steps when possible so v7x's 2nd TensorCore is used.
        if rows8 >= 2 * _SUBLANE:
            half = max(_SUBLANE, (rows8 // 2) // _SUBLANE * _SUBLANE)
            tile_rows = min(tile_rows, half)

    num_tiles = (seq_len + tile_rows - 1) // tile_rows
    grid = (num_tiles,)

    # ---- trace-time constant tables (float64 -> exact, then cast to f32) -------------
    j = np.arange(cols)
    exponent = (j // 2 * 2).astype(np.float64) / float(d_model)
    inv_freq = 1.0 / np.power(10000.0, exponent)                  # (cols,)
    phase = np.where(j % 2 == 1, np.pi / 2.0, 0.0)                # cos = sin(. + pi/2)

    r = np.arange(tile_rows, dtype=np.float64)[:, None]
    c_angle = r * inv_freq[None, :] + phase[None, :]              # (tile_rows, cols)
    sin_c = jnp.asarray(np.sin(c_angle).astype(np.float32))
    cos_c = jnp.asarray(np.cos(c_angle).astype(np.float32))

    t0 = (np.arange(num_tiles, dtype=np.float64) * float(tile_rows))[:, None]
    a_angle = t0 * inv_freq[None, :]                              # (num_tiles, cols)
    sin_a = jnp.asarray(np.sin(a_angle).astype(np.float32))
    cos_a = jnp.asarray(np.cos(a_angle).astype(np.float32))

    out_elem_bytes = jnp.dtype(out_dtype).itemsize
    cost = pl.CostEstimate(
        flops=3 * seq_len * cols,
        transcendentals=0,
        bytes_accessed=seq_len * cols * out_elem_bytes
        + (2 * tile_rows + 2 * num_tiles) * cols * 4,
    )

    out = pl.pallas_call(
        _pos_emb_kernel,
        out_shape=jax.ShapeDtypeStruct((seq_len, cols), out_dtype),
        grid_spec=pltpu.PrefetchScalarGridSpec(
            num_scalar_prefetch=0,
            grid=grid,
            in_specs=[
                # Constant index maps -> tables stay VMEM-resident across the grid.
                pl.BlockSpec((num_tiles, cols), lambda i: (0, 0)),   # sin_a
                pl.BlockSpec((num_tiles, cols), lambda i: (0, 0)),   # cos_a
                pl.BlockSpec((tile_rows, cols), lambda i: (0, 0)),   # sin_c
                pl.BlockSpec((tile_rows, cols), lambda i: (0, 0)),   # cos_c
            ],
            out_specs=pl.BlockSpec((tile_rows, cols), lambda i: (i, 0)),
        ),
        compiler_params=pltpu.CompilerParams(
            dimension_semantics=("parallel",),
            vmem_limit_bytes=32 * 1024 * 1024,
        ),
        cost_estimate=cost,
    )(sin_a, cos_a, sin_c, cos_c)

    return out


def _reference(seq_len, d_model):
    pos = jnp.arange(seq_len, dtype=jnp.float32)[:, None]
    two_i = jnp.arange(0, d_model, 2, dtype=jnp.float32)
    angle = pos / (10000.0 ** (two_i / d_model))
    enc = jnp.zeros((seq_len, d_model), jnp.float32)
    enc = enc.at[:, 0::2].set(jnp.sin(angle))
    enc = enc.at[:, 1::2].set(jnp.cos(angle))
    return enc


if __name__ == "__main__":
    key = jax.random.PRNGKey(0)
    batch, seq_len = 2, 8
    d_model, max_len = 32, 64

    # x contents are irrelevant to the forward pass (only its shape matters),
    # matching the PyTorch module.
    x = jax.random.randint(key, (batch, seq_len), 0, max_len, dtype=jnp.int32)

    out = position_embedding_forward(x, d_model=d_model, max_len=max_len)
    out = jax.block_until_ready(out)

    ref = _reference(seq_len, d_model)
    assert out.shape == (seq_len, d_model)
    assert out.dtype == jnp.float32
    assert jnp.allclose(out, ref, atol=1e-5, rtol=1e-5)

    print("KERNEL_OK")
</pallas_src>

<mosaic_0001>
module attributes {stable_mosaic.version = 11 : i64} {
  func.func @_pos_emb_kernel(%arg0: i32, %arg1: memref<1x32xf32, #tpu.memory_space<vmem>>, %arg2: memref<1x32xf32, #tpu.memory_space<vmem>>, %arg3: memref<8x32xf32, #tpu.memory_space<vmem>>, %arg4: memref<8x32xf32, #tpu.memory_space<vmem>>, %arg5: memref<8x32xf32, #tpu.memory_space<vmem>>) attributes {dimension_semantics = [#tpu.dimension_semantics<parallel>], iteration_bounds = array<i64: 1>, scalar_prefetch = 0 : i64, scratch_operands = 0 : i64, tpu.core_type = #tpu.core_type<tc>, window_params = [{pipeline_mode = #tpu.pipeline_mode<synchronous>, transform_indices = @transform_0, window_bounds = array<i64: 1, 32>}, {pipeline_mode = #tpu.pipeline_mode<synchronous>, transform_indices = @transform_1, window_bounds = array<i64: 1, 32>}, {pipeline_mode = #tpu.pipeline_mode<synchronous>, transform_indices = @transform_2, window_bounds = array<i64: 8, 32>}, {pipeline_mode = #tpu.pipeline_mode<synchronous>, transform_indices = @transform_3, window_bounds = array<i64: 8, 32>}, {transform_indices = @transform_4, window_bounds = array<i64: 8, 32>}]} {
    %0 = arith.index_cast %arg0 : i32 to index
    %c0 = arith.constant 0 : index
    %1 = vector.load %arg1[%0, %c0] : memref<1x32xf32, #tpu.memory_space<vmem>>, vector<1x32xf32>
    %2 = arith.index_cast %arg0 : i32 to index
    %c0_0 = arith.constant 0 : index
    %3 = vector.load %arg2[%2, %c0_0] : memref<1x32xf32, #tpu.memory_space<vmem>>, vector<1x32xf32>
    %c0_1 = arith.constant 0 : index
    %c0_2 = arith.constant 0 : index
    %4 = vector.load %arg4[%c0_1, %c0_2] : memref<8x32xf32, #tpu.memory_space<vmem>>, vector<8x32xf32>
    %5 = vector.broadcast %1 : vector<1x32xf32> to vector<8x32xf32>
    %6 = arith.mulf %5, %4 : vector<8x32xf32>
    %c0_3 = arith.constant 0 : index
    %c0_4 = arith.constant 0 : index
    %7 = vector.load %arg3[%c0_3, %c0_4] : memref<8x32xf32, #tpu.memory_space<vmem>>, vector<8x32xf32>
    %8 = vector.broadcast %3 : vector<1x32xf32> to vector<8x32xf32>
    %9 = arith.mulf %8, %7 : vector<8x32xf32>
    %10 = arith.addf %6, %9 : vector<8x32xf32>
    %c0_5 = arith.constant 0 : index
    %c0_6 = arith.constant 0 : index
    %11 = vector.load %arg5[%c0_5, %c0_6] : memref<8x32xf32, #tpu.memory_space<vmem>>, vector<8x32xf32>
    tpu.vector_store %arg5[%c0_5, %c0_6], %10 {strides = array<i32>} : memref<8x32xf32, #tpu.memory_space<vmem>>, vector<8x32xf32>,
    return
  }
  func.func @transform_0(%arg0: i32) -> (i32, i32) {
    %c0_i32 = arith.constant 0 : i32
    %c0_i32_0 = arith.constant 0 : i32
    %c0_i32_1 = arith.constant 0 : i32
    return %c0_i32, %c0_i32_0 : i32, i32
  }
  func.func @transform_1(%arg0: i32) -> (i32, i32) {
    %c0_i32 = arith.constant 0 : i32
    %c0_i32_0 = arith.constant 0 : i32
    %c0_i32_1 = arith.constant 0 : i32
    return %c0_i32, %c0_i32_0 : i32, i32
  }
  func.func @transform_2(%arg0: i32) -> (i32, i32) {
    %c0_i32 = arith.constant 0 : i32
    %c0_i32_0 = arith.constant 0 : i32
    %c0_i32_1 = arith.constant 0 : i32
    return %c0_i32, %c0_i32_0 : i32, i32
  }
  func.func @transform_3(%arg0: i32) -> (i32, i32) {
    %c0_i32 = arith.constant 0 : i32
    %c0_i32_0 = arith.constant 0 : i32
    %c0_i32_1 = arith.constant 0 : i32
    return %c0_i32, %c0_i32_0 : i32, i32
  }
  func.func @transform_4(%arg0: i32) -> (i32, i32) {
    %c0_i32 = arith.constant 0 : i32
    %c0_i32_0 = arith.constant 0 : i32
    return %arg0, %c0_i32 : i32, i32
  }
}

</mosaic_0001>

<llo_original>
// kernel: tpu_custom_call.1
$region0: #{tpu_custom_call.1}
  #allocation0 [shape = 'u32[]', space=smem, size = 0x4, offset = 0x4, fixed_abs, tag = 'smem constant byte address 0x4 - core index']
  #allocation1 [shape = 'u32[144,128]{1,0:T(1,128)}', space=vmem, size = 0x12000, scoped, tag = 'internal scratch']
  %s0 = inlined_call_operand.hbm [shape: f32[1,32], index: 0, kind: input, shape index: {}]
  %s1 = inlined_call_operand.vmem [shape: f32[1,32], index: 1, kind: input, shape index: {}]
  %s2 = inlined_call_operand.hbm [shape: f32[8,32], index: 2, kind: input, shape index: {}]
  %s3 = inlined_call_operand.vmem [shape: f32[8,32], index: 3, kind: input, shape index: {}]
  %s4 = inlined_call_operand.hbm [shape: f32[8,32], index: 4, kind: output, shape index: {}]
  %s5 = sld [smem:[#allocation0]]
  $region34: #{tpu_custom_call.1} parent=0
    _
  %s7 = ssub.s32 1, %s5
  %s8 = scalar_select 0, %s7, %s5
  $region1: #{tpu_custom_call.1} parent=0
    #allocation2 [shape = 'u8[512]{0}', space=vmem, size = 0x400, scoped, tag = 'input window, operand 0, single buffered']
    #allocation3 [shape = 's32[1]{0}', space=sflag, size = 0x4, scoped, tag = 'scoped memory for tpu_custom_call.1']
    #allocation4 [shape = 's32[1]{0}', space=sflag, size = 0x4, scoped, tag = 'scoped memory for tpu_custom_call.1']
    #allocation5 [shape = 'u8[4096]{0}', space=vmem, size = 0x1000, scoped, tag = 'input window, operand 2, single buffered']
    #allocation6 [shape = 's32[1]{0}', space=sflag, size = 0x4, scoped, tag = 'scoped memory for tpu_custom_call.1']
    #allocation7 [shape = 'u8[4096]{0}', space=vmem, size = 0x1000, scoped, tag = 'output window, operand 0, single buffered']
    %9 = vsyncpa [#allocation3], 0
    %10 = vsyncpa [#allocation6], 0
    %11 = vsyncpa [#allocation4], 0
    // Predicated region
    $region2: #{tpu_custom_call.1} parent=1 // pred_check
      _
    $region3: #{tpu_custom_call.1} parent=1 // pred_check_branch
      %13 = sbr.rel (0) target = $region5
    $region4: #{tpu_custom_call.1} parent=1 // pred_region
      %s15 = ssub.s32 16, 16
      %16 = vsyncadd [#allocation3], %s15
      %s18 = sshll.u32 [#allocation2], 4
      %s19 = int_to_ptr.vmem [resolvable:$true] %s18
      %21 = dma.hbm_to_vmem [thread:$0]  %s0, 16, %s19, [#allocation3]
    $region5: #{tpu_custom_call.1} parent=1 // pred_fallthru
      _
    // Predicated region
    $region6: #{tpu_custom_call.1} parent=1 // pred_check
      _
    $region7: #{tpu_custom_call.1} parent=1 // pred_check_branch
      %23 = sbr.rel (0) target = $region9
    $region8: #{tpu_custom_call.1} parent=1 // pred_region
      _
    $region9: #{tpu_custom_call.1} parent=1 // pred_fallthru
      _
    // Predicated region
    $region10: #{tpu_custom_call.1} parent=1 // pred_check
      _
    $region11: #{tpu_custom_call.1} parent=1 // pred_check_branch
      %25 = sbr.rel (0) target = $region13
    $region12: #{tpu_custom_call.1} parent=1 // pred_region
      %s27 = ssub.s32 128, 128
      %28 = vsyncadd [#allocation6], %s27
      %s30 = sshll.u32 [#allocation5], 4
      %s31 = int_to_ptr.vmem [resolvable:$true] %s30
      %33 = dma.hbm_to_vmem [thread:$0]  %s2, 128, %s31, [#allocation6]
    $region13: #{tpu_custom_call.1} parent=1 // pred_fallthru
      _
    // Predicated region
    $region14: #{tpu_custom_call.1} parent=1 // pred_check
      _
    $region15: #{tpu_custom_call.1} parent=1 // pred_check_branch
      %35 = sbr.rel (0) target = $region17
    $region16: #{tpu_custom_call.1} parent=1 // pred_region
      _
    $region17: #{tpu_custom_call.1} parent=1 // pred_fallthru
      _
    // Predicated region
    $region18: #{tpu_custom_call.1} parent=1 // pred_check
      _
    $region19: #{tpu_custom_call.1} parent=1 // pred_check_branch
      %37 = sbr.rel (0) target = $region21
    $region20: #{tpu_custom_call.1} parent=1 // pred_region
      %38 = dma.done [#allocation3], 16
    $region21: #{tpu_custom_call.1} parent=1 // pred_fallthru
      _
    // Predicated region
    $region22: #{tpu_custom_call.1} parent=1 // pred_check
      _
    $region23: #{tpu_custom_call.1} parent=1 // pred_check_branch
      %40 = sbr.rel (0) target = $region25
    $region24: #{tpu_custom_call.1} parent=1 // pred_region
      %41 = dma.done [#allocation6], 128
    $region25: #{tpu_custom_call.1} parent=1 // pred_fallthru
      _
    %v42 = vld [vmem:[#allocation2] sm:$0x1]
    %v43 = vld [vmem:[%s1] sm:$0x1]
    %v44 = vld [vmem:[%s3] sm:$0xff]
    %v46 = vlaneseq
    %v47 = vshrl.u32 %v46, 7
    %v48 = vsub.s32 0, %v47
    %v49 = vrot.slane %v42, %v48
    %v51 = vmul.f32 %v49, %v44
    %v52 = vld [vmem:[#allocation5] sm:$0xff]
    %v54 = vlaneseq
    %v55 = vshrl.u32 %v54, 7
    %v56 = vsub.s32 0, %v55
    %v57 = vrot.slane %v43, %v56
    %v59 = vmul.f32 %v57, %v52
    %v60 = vadd.f32 %v51, %v59
    %vm61 = vcmask 261120
    %62 = vst.msk [vmem:[#allocation7] sm:$0xff] %vm61, %v60
    // Predicated region
    $region26: #{tpu_custom_call.1} parent=1 // pred_check
      _
    $region27: #{tpu_custom_call.1} parent=1 // pred_check_branch
      %64 = sbr.rel (0) target = $region29
    $region28: #{tpu_custom_call.1} parent=1 // pred_region
      %s66 = ssub.s32 128, 128
      %67 = vsyncadd [#allocation4], %s66
      %s69 = sshll.u32 [#allocation7], 4
      %s70 = int_to_ptr.vmem [resolvable:$true] %s69
      %72 = dma.vmem_to_hbm [thread:$0]  %s70, 128, %s4, [#allocation4]
    $region29: #{tpu_custom_call.1} parent=1 // pred_fallthru
      _
    // Predicated region
    $region30: #{tpu_custom_call.1} parent=1 // pred_check
      _
    $region31: #{tpu_custom_call.1} parent=1 // pred_check_branch
      %74 = sbr.rel (0) target = $region33
    $region32: #{tpu_custom_call.1} parent=1 // pred_region
      %75 = dma.done [#allocation4], 128
    $region33: #{tpu_custom_call.1} parent=1 // pred_fallthru
      _
    %76 = vsyncpa [#allocation3], 1
    %77 = vsyncpa [#allocation6], 1
    %78 = vsyncpa [#allocation4], 1

</llo_original>
